<compile_context>
chip_gen: v5e
topology: v5e:2x2
jax: 0.10.0
libtpu: 0.0.40
codegen_flags: <defaults>
</compile_context>

<pallas_src>
import jax
import jax.numpy as jnp
from jax.experimental import pallas as pl
from jax.experimental.pallas import tpu as pltpu


def _round_up(n, m):
    return ((n + m - 1) // m) * m


def _qnet_kernel(x_ref, w1_ref, b1_ref, w2_ref, b2_ref, w3_ref, b3_ref, o_ref):
    # Transposed layout: batch is the lane (last) dim everywhere.
    #   x_ref  : (in_dim, TB)   f32       (streamed per grid step)
    #   w1_ref : (H, in_dim)    f32 (VPU path) / compute dtype (MXU path)
    #   b1_ref : (H, 1)         f32
    #   w2_ref : (H, H)         compute dtype
    #   b2_ref : (H, 1)         f32
    #   w3_ref : (out_dim, H)   compute dtype
    #   b3_ref : (out_dim, 1)   f32
    #   o_ref  : (out_dim, TB)  f32
    in_dim = x_ref.shape[0]

    b1 = b1_ref[...].astype(jnp.float32)
    b2 = b2_ref[...].astype(jnp.float32)
    b3 = b3_ref[...].astype(jnp.float32)

    # ---- Layer 1: Linear(in_dim, 64) + ReLU --------------------------------
    if in_dim <= 8:
        # in_dim is tiny (MountainCar: 2): a handful of broadcast
        # multiply-adds on the VPU in f32 instead of a K-padded MXU pass.
        x = x_ref[...].astype(jnp.float32)        # (in_dim, TB)
        w1 = w1_ref[...].astype(jnp.float32)      # (H, in_dim)
        h1 = w1[:, 0:1] * x[0:1, :] + b1          # (H, TB)
        for f in range(1, in_dim):
            h1 = h1 + w1[:, f:f + 1] * x[f:f + 1, :]
    else:
        h1 = jnp.dot(w1_ref[...], x_ref[...].astype(w1_ref.dtype),
                     preferred_element_type=jnp.float32) + b1
    h1 = jnp.maximum(h1, 0.0)                     # (H, TB), f32

    # ---- Layer 2: (H,H) @ (H,TB) -> (H,TB); MXU N = TB (full width) --------
    h2 = jnp.dot(w2_ref[...], h1.astype(w2_ref.dtype),
                 preferred_element_type=jnp.float32)
    h2 = jnp.maximum(h2 + b2, 0.0)

    # ---- Layer 3: (out_dim,H) @ (H,TB) -> (out_dim,TB) ----------------------
    out = jnp.dot(w3_ref[...], h2.astype(w3_ref.dtype),
                  preferred_element_type=jnp.float32) + b3
    o_ref[...] = out.astype(o_ref.dtype)


def qnetwork_forward(x, params, *, block_batch=2048, use_bf16=True):
    """Fused forward pass of the 2-hidden-layer Q-network.

    x: (batch, in_dim) float32
    params: dict with w1 (in_dim,64), b1 (1,64), w2 (64,64), b2 (1,64),
            w3 (64,out_dim), b3 (1,out_dim); weights stored as (fan_in, fan_out).
    returns: (batch, out_dim) float32
    """
    batch, in_dim = x.shape
    hidden = params["w1"].shape[1]
    out_dim = params["w3"].shape[1]

    compute_dtype = jnp.bfloat16 if use_bf16 else jnp.float32

    # Batch maps to the lane dim -> tile must be a multiple of 128.
    if batch <= 128:
        tb = 128
    else:
        tb = min(block_batch, _round_up(batch, 128))
        # Keep >= 2 grid steps when the batch allows it, so the v7x megacore
        # ("parallel" batch axis) has work for both TensorCores.
        if _round_up(batch, tb) // tb < 2:
            tb = max(128, _round_up(pl.cdiv(batch, 2), 128))
    padded_batch = _round_up(batch, tb)

    # Transpose so batch is the lane (last) dim: lane-dense x DMAs, unmasked
    # lane-dense output stores, MXU N = TB.  x stays f32 (no wrapper cast of
    # the streamed operand); only the resident weights are cast (once, free).
    xT = x.T                                                   # (in_dim, batch)
    if padded_batch != batch:
        xT = jnp.pad(xT, ((0, 0), (0, padded_batch - batch)))

    w1T = params["w1"].T.astype(jnp.float32 if in_dim <= 8 else compute_dtype)
    w2T = params["w2"].T.astype(compute_dtype)
    w3T = params["w3"].T.astype(compute_dtype)
    b1 = params["b1"].reshape(hidden, 1).astype(jnp.float32)
    b2 = params["b2"].reshape(hidden, 1).astype(jnp.float32)
    b3 = params["b3"].reshape(out_dim, 1).astype(jnp.float32)

    # Weights/biases: full-extent blocks with a constant index_map -> fetched
    # once, VMEM-resident for every grid step.  (They are only ~16-48 KiB, so
    # the default buffering costs nothing; no extra buffering control needed.)
    def resident(a):
        return pl.BlockSpec(a.shape, lambda i: (0, 0))

    grid = (padded_batch // tb,)

    outT = pl.pallas_call(
        _qnet_kernel,
        out_shape=jax.ShapeDtypeStruct((out_dim, padded_batch), jnp.float32),
        grid=grid,
        in_specs=[
            pl.BlockSpec((in_dim, tb), lambda i: (0, i)),   # streamed x tiles
            resident(w1T), resident(b1),
            resident(w2T), resident(b2),
            resident(w3T), resident(b3),
        ],
        out_specs=pl.BlockSpec((out_dim, tb), lambda i: (0, i)),
        compiler_params=pltpu.CompilerParams(
            dimension_semantics=("parallel",),   # v7x: shard batch over 2 TCs
        ),
    )(xT, w1T, b1, w2T, b2, w3T, b3)

    # Tail handling only when the batch is not tile-aligned.
    if padded_batch != batch:
        return outT[:, :batch].T
    return outT.T


def init_params(key, in_dim, out_dim, hidden=64):
    """Deterministic init mimicking torch.nn.Linear default (U[-1/sqrt(fan_in), 1/sqrt(fan_in)])."""
    ks = jax.random.split(key, 6)

    def lin(kw, kb, fan_in, fan_out):
        bound = 1.0 / jnp.sqrt(jnp.asarray(fan_in, jnp.float32))
        w = jax.random.uniform(kw, (fan_in, fan_out), jnp.float32, -bound, bound)
        b = jax.random.uniform(kb, (1, fan_out), jnp.float32, -bound, bound)
        return w, b

    w1, b1 = lin(ks[0], ks[1], in_dim, hidden)
    w2, b2 = lin(ks[2], ks[3], hidden, hidden)
    w3, b3 = lin(ks[4], ks[5], hidden, out_dim)
    return dict(w1=w1, b1=b1, w2=w2, b2=b2, w3=w3, b3=b3)


def reference_forward(x, p):
    h1 = jnp.maximum(x @ p["w1"] + p["b1"], 0.0)
    h2 = jnp.maximum(h1 @ p["w2"] + p["b2"], 0.0)
    return h2 @ p["w3"] + p["b3"]


if __name__ == "__main__":
    # MountainCar: observation dim = 2, actions = 3.
    in_dim, out_dim = 2, 3

    key = jax.random.PRNGKey(0)
    k_params, k_x1, k_x2 = jax.random.split(key, 3)
    params = init_params(k_params, in_dim, out_dim)

    # Case 1: tiny batch (single grid step), f32 operands, tight tolerance.
    x_small = jax.random.normal(k_x1, (8, in_dim), jnp.float32)
    out_small = jax.block_until_ready(
        qnetwork_forward(x_small, params, use_bf16=False))
    ref_small = reference_forward(x_small, params)
    assert out_small.shape == (8, out_dim)
    assert jnp.allclose(out_small, ref_small, atol=1e-5, rtol=1e-5), \
        "f32 small-batch mismatch vs JAX reference"

    # Case 2: multi-tile grid with a ragged tail (300 rows, tile 128), f32.
    x_big = jax.random.normal(k_x2, (300, in_dim), jnp.float32)
    out_big = jax.block_until_ready(
        qnetwork_forward(x_big, params, block_batch=128, use_bf16=False))
    ref_big = reference_forward(x_big, params)
    assert out_big.shape == (300, out_dim)
    assert jnp.allclose(out_big, ref_big, atol=1e-5, rtol=1e-5), \
        "f32 multi-tile mismatch vs JAX reference"

    # Case 3: default bf16 MXU path (performance default), loose tolerance.
    out_bf16 = jax.block_until_ready(
        qnetwork_forward(x_big, params, block_batch=128))
    assert out_bf16.shape == (300, out_dim)
    assert jnp.allclose(out_bf16, ref_big, atol=0.15, rtol=0.15), \
        "bf16 path diverged too far from f32 reference"

    print("KERNEL_OK")
</pallas_src>

<mosaic_0001>
module attributes {stable_mosaic.version = 11 : i64} {
  func.func @_qnet_kernel(%arg0: i32, %arg1: memref<2x128xf32, #tpu.memory_space<vmem>>, %arg2: memref<64x2xf32, #tpu.memory_space<vmem>>, %arg3: memref<64x1xf32, #tpu.memory_space<vmem>>, %arg4: memref<64x64xf32, #tpu.memory_space<vmem>>, %arg5: memref<64x1xf32, #tpu.memory_space<vmem>>, %arg6: memref<3x64xf32, #tpu.memory_space<vmem>>, %arg7: memref<3x1xf32, #tpu.memory_space<vmem>>, %arg8: memref<3x128xf32, #tpu.memory_space<vmem>>) attributes {dimension_semantics = [#tpu.dimension_semantics<parallel>], iteration_bounds = array<i64: 1>, scalar_prefetch = 0 : i64, scratch_operands = 0 : i64, tpu.core_type = #tpu.core_type<tc>, window_params = [{transform_indices = @transform_0, window_bounds = array<i64: 2, 128>}, {pipeline_mode = #tpu.pipeline_mode<synchronous>, transform_indices = @transform_1, window_bounds = array<i64: 64, 2>}, {pipeline_mode = #tpu.pipeline_mode<synchronous>, transform_indices = @transform_2, window_bounds = array<i64: 64, 1>}, {pipeline_mode = #tpu.pipeline_mode<synchronous>, transform_indices = @transform_3, window_bounds = array<i64: 64, 64>}, {pipeline_mode = #tpu.pipeline_mode<synchronous>, transform_indices = @transform_4, window_bounds = array<i64: 64, 1>}, {pipeline_mode = #tpu.pipeline_mode<synchronous>, transform_indices = @transform_5, window_bounds = array<i64: 3, 64>}, {pipeline_mode = #tpu.pipeline_mode<synchronous>, transform_indices = @transform_6, window_bounds = array<i64: 3, 1>}, {transform_indices = @transform_7, window_bounds = array<i64: 3, 128>}]} {
    %c0 = arith.constant 0 : index
    %c0_0 = arith.constant 0 : index
    %0 = vector.load %arg3[%c0, %c0_0] : memref<64x1xf32, #tpu.memory_space<vmem>>, vector<64x1xf32>
    %c0_1 = arith.constant 0 : index
    %c0_2 = arith.constant 0 : index
    %1 = vector.load %arg5[%c0_1, %c0_2] : memref<64x1xf32, #tpu.memory_space<vmem>>, vector<64x1xf32>
    %c0_3 = arith.constant 0 : index
    %c0_4 = arith.constant 0 : index
    %2 = vector.load %arg7[%c0_3, %c0_4] : memref<3x1xf32, #tpu.memory_space<vmem>>, vector<3x1xf32>
    %c0_5 = arith.constant 0 : index
    %c0_6 = arith.constant 0 : index
    %3 = vector.load %arg1[%c0_5, %c0_6] : memref<2x128xf32, #tpu.memory_space<vmem>>, vector<2x128xf32>
    %c0_7 = arith.constant 0 : index
    %c0_8 = arith.constant 0 : index
    %4 = vector.load %arg2[%c0_7, %c0_8] : memref<64x2xf32, #tpu.memory_space<vmem>>, vector<64x2xf32>
    %5 = vector.extract_strided_slice %4 {offsets = [0, 0], sizes = [64, 1], strides = [1, 1]} : vector<64x2xf32> to vector<64x1xf32>
    %6 = vector.extract_strided_slice %3 {offsets = [0, 0], sizes = [1, 128], strides = [1, 1]} : vector<2x128xf32> to vector<1x128xf32>
    %7 = vector.broadcast %5 : vector<64x1xf32> to vector<64x128xf32>
    %8 = vector.broadcast %6 : vector<1x128xf32> to vector<64x128xf32>
    %9 = arith.mulf %7, %8 : vector<64x128xf32>
    %10 = vector.broadcast %0 : vector<64x1xf32> to vector<64x128xf32>
    %11 = arith.addf %9, %10 : vector<64x128xf32>
    %12 = vector.extract_strided_slice %4 {offsets = [0, 1], sizes = [64, 1], strides = [1, 1]} : vector<64x2xf32> to vector<64x1xf32>
    %13 = vector.extract_strided_slice %3 {offsets = [1, 0], sizes = [1, 128], strides = [1, 1]} : vector<2x128xf32> to vector<1x128xf32>
    %14 = vector.broadcast %12 : vector<64x1xf32> to vector<64x128xf32>
    %15 = vector.broadcast %13 : vector<1x128xf32> to vector<64x128xf32>
    %16 = arith.mulf %14, %15 : vector<64x128xf32>
    %17 = arith.addf %11, %16 : vector<64x128xf32>
    %cst = arith.constant 0.000000e+00 : f32
    %18 = vector.broadcast %cst : f32 to vector<64x128xf32>
    %19 = arith.maximumf %17, %18 : vector<64x128xf32>
    %c0_9 = arith.constant 0 : index
    %c0_10 = arith.constant 0 : index
    %20 = vector.load %arg4[%c0_9, %c0_10] : memref<64x64xf32, #tpu.memory_space<vmem>>, vector<64x64xf32>
    %cst_11 = arith.constant dense<0.000000e+00> : vector<64x128xf32>
    %21 = tpu.matmul %20, %19, %cst_11 {dimension_numbers = #tpu.dot_dimension_numbers<[1], [0], [0], [1], [0, 0, 1, 1], [], []>} : vector<64x64xf32>, vector<64x128xf32>, vector<64x128xf32> -> vector<64x128xf32>
    %22 = vector.broadcast %1 : vector<64x1xf32> to vector<64x128xf32>
    %23 = arith.addf %21, %22 : vector<64x128xf32>
    %cst_12 = arith.constant 0.000000e+00 : f32
    %24 = vector.broadcast %cst_12 : f32 to vector<64x128xf32>
    %25 = arith.maximumf %23, %24 : vector<64x128xf32>
    %c0_13 = arith.constant 0 : index
    %c0_14 = arith.constant 0 : index
    %26 = vector.load %arg6[%c0_13, %c0_14] : memref<3x64xf32, #tpu.memory_space<vmem>>, vector<3x64xf32>
    %cst_15 = arith.constant dense<0.000000e+00> : vector<3x128xf32>
    %27 = tpu.matmul %26, %25, %cst_15 {dimension_numbers = #tpu.dot_dimension_numbers<[1], [0], [0], [1], [0, 0, 1, 1], [], []>} : vector<3x64xf32>, vector<64x128xf32>, vector<3x128xf32> -> vector<3x128xf32>
    %28 = vector.broadcast %2 : vector<3x1xf32> to vector<3x128xf32>
    %29 = arith.addf %27, %28 : vector<3x128xf32>
    %c0_16 = arith.constant 0 : index
    %c0_17 = arith.constant 0 : index
    %30 = vector.load %arg8[%c0_16, %c0_17] : memref<3x128xf32, #tpu.memory_space<vmem>>, vector<3x128xf32>
    tpu.vector_store %arg8[%c0_16, %c0_17], %29 {strides = array<i32>} : memref<3x128xf32, #tpu.memory_space<vmem>>, vector<3x128xf32>,
    return
  }
  func.func @transform_0(%arg0: i32) -> (i32, i32) {
    %c0_i32 = arith.constant 0 : i32
    %c0_i32_0 = arith.constant 0 : i32
    return %c0_i32, %arg0 : i32, i32
  }
  func.func @transform_1(%arg0: i32) -> (i32, i32) {
    %c0_i32 = arith.constant 0 : i32
    %c0_i32_0 = arith.constant 0 : i32
    %c0_i32_1 = arith.constant 0 : i32
    return %c0_i32, %c0_i32_0 : i32, i32
  }
  func.func @transform_2(%arg0: i32) -> (i32, i32) {
    %c0_i32 = arith.constant 0 : i32
    %c0_i32_0 = arith.constant 0 : i32
    %c0_i32_1 = arith.constant 0 : i32
    return %c0_i32, %c0_i32_0 : i32, i32
  }
  func.func @transform_3(%arg0: i32) -> (i32, i32) {
    %c0_i32 = arith.constant 0 : i32
    %c0_i32_0 = arith.constant 0 : i32
    %c0_i32_1 = arith.constant 0 : i32
    return %c0_i32, %c0_i32_0 : i32, i32
  }
  func.func @transform_4(%arg0: i32) -> (i32, i32) {
    %c0_i32 = arith.constant 0 : i32
    %c0_i32_0 = arith.constant 0 : i32
    %c0_i32_1 = arith.constant 0 : i32
    return %c0_i32, %c0_i32_0 : i32, i32
  }
  func.func @transform_5(%arg0: i32) -> (i32, i32) {
    %c0_i32 = arith.constant 0 : i32
    %c0_i32_0 = arith.constant 0 : i32
    %c0_i32_1 = arith.constant 0 : i32
    return %c0_i32, %c0_i32_0 : i32, i32
  }
  func.func @transform_6(%arg0: i32) -> (i32, i32) {
    %c0_i32 = arith.constant 0 : i32
    %c0_i32_0 = arith.constant 0 : i32
    %c0_i32_1 = arith.constant 0 : i32
    return %c0_i32, %c0_i32_0 : i32, i32
  }
  func.func @transform_7(%arg0: i32) -> (i32, i32) {
    %c0_i32 = arith.constant 0 : i32
    %c0_i32_0 = arith.constant 0 : i32
    return %c0_i32, %arg0 : i32, i32
  }
}

</mosaic_0001>

<llo_original>
// kernel: tpu_custom_call.1
$region0: #{tpu_custom_call.1}
  #allocation0 [shape = 'u32[]', space=smem, size = 0x4, offset = 0x4, fixed_abs, tag = 'smem constant byte address 0x4 - core index']
  #allocation1 [shape = 'u32[72,128]{1,0:T(1,128)}', space=vmem, size = 0x9000, scoped, tag = 'internal scratch']
  %s0 = inlined_call_operand.vmem [shape: f32[2,128], index: 0, kind: input, shape index: {}]
  %s1 = inlined_call_operand.vmem [shape: f32[64,2], index: 1, kind: input, shape index: {}]
  %s2 = inlined_call_operand.vmem [shape: f32[64,1], index: 2, kind: input, shape index: {}]
  %s3 = inlined_call_operand.vmem [shape: f32[64,64], index: 3, kind: input, shape index: {}]
  %s4 = inlined_call_operand.vmem [shape: f32[64,1], index: 4, kind: input, shape index: {}]
  %s5 = inlined_call_operand.vmem [shape: f32[3,64], index: 5, kind: input, shape index: {}]
  %s6 = inlined_call_operand.vmem [shape: f32[3,1], index: 6, kind: input, shape index: {}]
  %s7 = inlined_call_operand.hbm [shape: f32[3,128], index: 7, kind: output, shape index: {}]
  %s8 = sld [smem:[#allocation0]]
  $region38: #{tpu_custom_call.1} parent=0
    _
  %s10 = ssub.s32 1, %s8
  %s11 = scalar_select 0, %s10, %s8
  $region1: #{tpu_custom_call.1} parent=0
    #allocation2 [shape = 'u8[2048]{0}', space=vmem, size = 0x800, scoped, tag = 'output window, operand 0, single buffered']
    #allocation3 [shape = 's32[1]{0}', space=sflag, size = 0x4, scoped, tag = 'scoped memory for tpu_custom_call.1']
    %12 = vsyncpa [#allocation3], 0
    // Predicated region
    $region2: #{tpu_custom_call.1} parent=1 // pred_check
      _
    $region3: #{tpu_custom_call.1} parent=1 // pred_check_branch
      %14 = sbr.rel (0) target = $region5
    $region4: #{tpu_custom_call.1} parent=1 // pred_region
      _
    $region5: #{tpu_custom_call.1} parent=1 // pred_fallthru
      _
    // Predicated region
    $region6: #{tpu_custom_call.1} parent=1 // pred_check
      _
    $region7: #{tpu_custom_call.1} parent=1 // pred_check_branch
      %16 = sbr.rel (0) target = $region9
    $region8: #{tpu_custom_call.1} parent=1 // pred_region
      _
    $region9: #{tpu_custom_call.1} parent=1 // pred_fallthru
      _
    // Predicated region
    $region10: #{tpu_custom_call.1} parent=1 // pred_check
      _
    $region11: #{tpu_custom_call.1} parent=1 // pred_check_branch
      %18 = sbr.rel (0) target = $region13
    $region12: #{tpu_custom_call.1} parent=1 // pred_region
      _
    $region13: #{tpu_custom_call.1} parent=1 // pred_fallthru
      _
    // Predicated region
    $region14: #{tpu_custom_call.1} parent=1 // pred_check
      _
    $region15: #{tpu_custom_call.1} parent=1 // pred_check_branch
      %20 = sbr.rel (0) target = $region17
    $region16: #{tpu_custom_call.1} parent=1 // pred_region
      _
    $region17: #{tpu_custom_call.1} parent=1 // pred_fallthru
      _
    // Predicated region
    $region18: #{tpu_custom_call.1} parent=1 // pred_check
      _
    $region19: #{tpu_custom_call.1} parent=1 // pred_check_branch
      %22 = sbr.rel (0) target = $region21
    $region20: #{tpu_custom_call.1} parent=1 // pred_region
      _
    $region21: #{tpu_custom_call.1} parent=1 // pred_fallthru
      _
    // Predicated region
    $region22: #{tpu_custom_call.1} parent=1 // pred_check
      _
    $region23: #{tpu_custom_call.1} parent=1 // pred_check_branch
      %24 = sbr.rel (0) target = $region25
    $region24: #{tpu_custom_call.1} parent=1 // pred_region
      _
    $region25: #{tpu_custom_call.1} parent=1 // pred_fallthru
      _
    // Predicated region
    $region26: #{tpu_custom_call.1} parent=1 // pred_check
      _
    $region27: #{tpu_custom_call.1} parent=1 // pred_check_branch
      %26 = sbr.rel (0) target = $region29
    $region28: #{tpu_custom_call.1} parent=1 // pred_region
      _
    $region29: #{tpu_custom_call.1} parent=1 // pred_fallthru
      _
    %v27 = vld [vmem:[%s2] sm:$0xff]
    %v28 = vld [vmem:[%s2 + $0x8] sm:$0xff]
    %v29 = vld [vmem:[%s2 + $0x10] sm:$0xff]
    %v30 = vld [vmem:[%s2 + $0x18] sm:$0xff]
    %v31 = vld [vmem:[%s2 + $0x20] sm:$0xff]
    %v32 = vld [vmem:[%s2 + $0x28] sm:$0xff]
    %v33 = vld [vmem:[%s2 + $0x30] sm:$0xff]
    %v34 = vld [vmem:[%s2 + $0x38] sm:$0xff]
    %v35 = vld [vmem:[%s4] sm:$0xff]
    %v36 = vld [vmem:[%s4 + $0x8] sm:$0xff]
    %v37 = vld [vmem:[%s4 + $0x10] sm:$0xff]
    %v38 = vld [vmem:[%s4 + $0x18] sm:$0xff]
    %v39 = vld [vmem:[%s4 + $0x20] sm:$0xff]
    %v40 = vld [vmem:[%s4 + $0x28] sm:$0xff]
    %v41 = vld [vmem:[%s4 + $0x30] sm:$0xff]
    %v42 = vld [vmem:[%s4 + $0x38] sm:$0xff]
    %v43 = vld [vmem:[%s6] sm:$0x7]
    %v44 = vld [vmem:[%s0] sm:$0x3]
    %v45 = vld [vmem:[%s1] sm:$0xff]
    %v46 = vld [vmem:[%s1 + $0x8] sm:$0xff]
    %v47 = vld [vmem:[%s1 + $0x10] sm:$0xff]
    %v48 = vld [vmem:[%s1 + $0x18] sm:$0xff]
    %v49 = vld [vmem:[%s1 + $0x20] sm:$0xff]
    %v50 = vld [vmem:[%s1 + $0x28] sm:$0xff]
    %v51 = vld [vmem:[%s1 + $0x30] sm:$0xff]
    %v52 = vld [vmem:[%s1 + $0x38] sm:$0xff]
    %54 = vset.pattern.permute.xlu0 0
    %55 = vperm.xlu0 %54, %v45
    %v56 = vpop.permute.xlu0 %55
    %59 = vset.pattern.permute.xlu0 0
    %60 = vperm.xlu0 %59, %v46
    %v61 = vpop.permute.xlu0 %60
    %64 = vset.pattern.permute.xlu0 0
    %65 = vperm.xlu0 %64, %v47
    %v66 = vpop.permute.xlu0 %65
    %69 = vset.pattern.permute.xlu0 0
    %70 = vperm.xlu0 %69, %v48
    %v71 = vpop.permute.xlu0 %70
    %74 = vset.pattern.permute.xlu0 0
    %75 = vperm.xlu0 %74, %v49
    %v76 = vpop.permute.xlu0 %75
    %79 = vset.pattern.permute.xlu0 0
    %80 = vperm.xlu0 %79, %v50
    %v81 = vpop.permute.xlu0 %80
    %84 = vset.pattern.permute.xlu0 0
    %85 = vperm.xlu0 %84, %v51
    %v86 = vpop.permute.xlu0 %85
    %89 = vset.pattern.permute.xlu0 0
    %90 = vperm.xlu0 %89, %v52
    %v91 = vpop.permute.xlu0 %90
    %v93 = vperm.slane %v44, 0
    %v94 = vmul.f32 %v56, %v93
    %v95 = vmul.f32 %v61, %v93
    %v96 = vmul.f32 %v66, %v93
    %v97 = vmul.f32 %v71, %v93
    %v98 = vmul.f32 %v76, %v93
    %v99 = vmul.f32 %v81, %v93
    %v100 = vmul.f32 %v86, %v93
    %v101 = vmul.f32 %v91, %v93
    %103 = vset.pattern.permute.xlu0 0
    %104 = vperm.xlu0 %103, %v27
    %v105 = vpop.permute.xlu0 %104
    %108 = vset.pattern.permute.xlu0 0
    %109 = vperm.xlu0 %108, %v28
    %v110 = vpop.permute.xlu0 %109
    %113 = vset.pattern.permute.xlu0 0
    %114 = vperm.xlu0 %113, %v29
    %v115 = vpop.permute.xlu0 %114
    %118 = vset.pattern.permute.xlu0 0
    %119 = vperm.xlu0 %118, %v30
    %v120 = vpop.permute.xlu0 %119
    %123 = vset.pattern.permute.xlu0 0
    %124 = vperm.xlu0 %123, %v31
    %v125 = vpop.permute.xlu0 %124
    %128 = vset.pattern.permute.xlu0 0
    %129 = vperm.xlu0 %128, %v32
    %v130 = vpop.permute.xlu0 %129
    %133 = vset.pattern.permute.xlu0 0
    %134 = vperm.xlu0 %133, %v33
    %v135 = vpop.permute.xlu0 %134
    %138 = vset.pattern.permute.xlu0 0
    %139 = vperm.xlu0 %138, %v34
    %v140 = vpop.permute.xlu0 %139
    %v142 = vadd.f32 %v94, %v105
    %v143 = vadd.f32 %v95, %v110
    %v144 = vadd.f32 %v96, %v115
    %v145 = vadd.f32 %v97, %v120
    %v146 = vadd.f32 %v98, %v125
    %v147 = vadd.f32 %v99, %v130
    %v148 = vadd.f32 %v100, %v135
    %v149 = vadd.f32 %v101, %v140
    %150 = vset.pattern.permute.xlu0 1
    %151 = vperm.xlu0 %150, %v45
    %v152 = vpop.permute.xlu0 %151
    %154 = vset.pattern.permute.xlu0 1
    %155 = vperm.xlu0 %154, %v46
    %v156 = vpop.permute.xlu0 %155
    %158 = vset.pattern.permute.xlu0 1
    %159 = vperm.xlu0 %158, %v47
    %v160 = vpop.permute.xlu0 %159
    %162 = vset.pattern.permute.xlu0 1
    %163 = vperm.xlu0 %162, %v48
    %v164 = vpop.permute.xlu0 %163
    %166 = vset.pattern.permute.xlu0 1
    %167 = vperm.xlu0 %166, %v49
    %v168 = vpop.permute.xlu0 %167
    %170 = vset.pattern.permute.xlu0 1
    %171 = vperm.xlu0 %170, %v50
    %v172 = vpop.permute.xlu0 %171
    %174 = vset.pattern.permute.xlu0 1
    %175 = vperm.xlu0 %174, %v51
    %v176 = vpop.permute.xlu0 %175
    %178 = vset.pattern.permute.xlu0 1
    %179 = vperm.xlu0 %178, %v52
    %v180 = vpop.permute.xlu0 %179
    %v182 = vperm.slane %v44, 1
    %v183 = vmul.f32 %v152, %v182
    %v184 = vmul.f32 %v156, %v182
    %v185 = vmul.f32 %v160, %v182
    %v186 = vmul.f32 %v164, %v182
    %v187 = vmul.f32 %v168, %v182
    %v188 = vmul.f32 %v172, %v182
    %v189 = vmul.f32 %v176, %v182
    %v190 = vmul.f32 %v180, %v182
    %v191 = vadd.f32 %v142, %v183
    %v192 = vadd.f32 %v143, %v184
    %v193 = vadd.f32 %v144, %v185
    %v194 = vadd.f32 %v145, %v186
    %v195 = vadd.f32 %v146, %v187
    %v196 = vadd.f32 %v147, %v188
    %v197 = vadd.f32 %v148, %v189
    %v198 = vadd.f32 %v149, %v190
    %v199 = vmax.f32 %v191, 0.0
    %v200 = vmax.f32 %v192, 0.0
    %v201 = vmax.f32 %v193, 0.0
    %v202 = vmax.f32 %v194, 0.0
    %v203 = vmax.f32 %v195, 0.0
    %v204 = vmax.f32 %v196, 0.0
    %v205 = vmax.f32 %v197, 0.0
    %v206 = vmax.f32 %v198, 0.0
    %v207 = vld [vmem:[%s3] sm:$0xff]
    %v208 = vld [vmem:[%s3 + $0x8] sm:$0xff]
    %v209 = vld [vmem:[%s3 + $0x10] sm:$0xff]
    %v210 = vld [vmem:[%s3 + $0x18] sm:$0xff]
    %v211 = vld [vmem:[%s3 + $0x20] sm:$0xff]
    %v212 = vld [vmem:[%s3 + $0x28] sm:$0xff]
    %v213 = vld [vmem:[%s3 + $0x30] sm:$0xff]
    %v214 = vld [vmem:[%s3 + $0x38] sm:$0xff]
    %216 = vset.pattern.permute.xlu0 0
    %217 = vperm.xlu0 %216, %v35
    %v218 = vpop.permute.xlu0 %217
    %221 = vset.pattern.permute.xlu0 0
    %222 = vperm.xlu0 %221, %v36
    %v223 = vpop.permute.xlu0 %222
    %226 = vset.pattern.permute.xlu0 0
    %227 = vperm.xlu0 %226, %v37
    %v228 = vpop.permute.xlu0 %227
    %231 = vset.pattern.permute.xlu0 0
    %232 = vperm.xlu0 %231, %v38
    %v233 = vpop.permute.xlu0 %232
    %236 = vset.pattern.permute.xlu0 0
    %237 = vperm.xlu0 %236, %v39
    %v238 = vpop.permute.xlu0 %237
    %241 = vset.pattern.permute.xlu0 0
    %242 = vperm.xlu0 %241, %v40
    %v243 = vpop.permute.xlu0 %242
    %246 = vset.pattern.permute.xlu0 0
    %247 = vperm.xlu0 %246, %v41
    %v248 = vpop.permute.xlu0 %247
    %251 = vset.pattern.permute.xlu0 0
    %252 = vperm.xlu0 %251, %v42
    %v253 = vpop.permute.xlu0 %252
    %vm255 = vcmask 523264
    %v257 = vsel %vm255, %v207, 0
    %v260 = vsel %vm255, %v208, 0
    %v263 = vsel %vm255, %v209, 0
    %v266 = vsel %vm255, %v210, 0
    %v269 = vsel %vm255, %v211, 0
    %v272 = vsel %vm255, %v212, 0
    %v275 = vsel %vm255, %v213, 0
    %v278 = vsel %vm255, %v214, 0
    %280 = vmatpush.msra.mxu0 0.0
    %281 = vmatpush.msra.mxu0 0.0
    %282 = vmatpush.msra.mxu0 0.0
    %283 = vmatpush.msra.mxu0 0.0
    %284 = vmatpush.msra.mxu0 0.0
    %285 = vmatpush.msra.mxu0 0.0
    %286 = vmatpush.msra.mxu0 0.0
    %287 = vmatpush.msra.mxu0 0.0
    %288 = vmatpush.msra.mxu0 %v206
    %289 = vmatpush.msra.mxu0 %v205
    %290 = vmatpush.msra.mxu0 %v204
    %291 = vmatpush.msra.mxu0 %v203
    %292 = vmatpush.msra.mxu0 %v202
    %293 = vmatpush.msra.mxu0 %v201
    %294 = vmatpush.msra.mxu0 %v200
    %295 = vmatpush.msra.mxu0 %v199
    %296 = vmatmul.f32.gmra.mxu0 %v257
    %v297 = vpop.f32.mrf.mxu0
    %v298 = vadd.f32 %v218, %v297
    %299 = vmatmul.f32.gmra.mxu0 %v260
    %v300 = vpop.f32.mrf.mxu0
    %v301 = vadd.f32 %v223, %v300
    %302 = vmatmul.f32.gmra.mxu0 %v263
    %v303 = vpop.f32.mrf.mxu0
    %v304 = vadd.f32 %v228, %v303
    %305 = vmatmul.f32.gmra.mxu0 %v266
    %v306 = vpop.f32.mrf.mxu0
    %v307 = vadd.f32 %v233, %v306
    %308 = vmatmul.f32.gmra.mxu0 %v269
    %v309 = vpop.f32.mrf.mxu0
    %v310 = vadd.f32 %v238, %v309
    %311 = vmatmul.f32.gmra.mxu0 %v272
    %v312 = vpop.f32.mrf.mxu0
    %v313 = vadd.f32 %v243, %v312
    %314 = vmatmul.f32.gmra.mxu0 %v275
    %v315 = vpop.f32.mrf.mxu0
    %v316 = vadd.f32 %v248, %v315
    %317 = vmatmul.f32.gmra.mxu0 %v278
    %v318 = vpop.f32.mrf.mxu0
    %v319 = vadd.f32 %v253, %v318
    %320 = vdwg.mxu0
    %v321 = vmax.f32 %v298, 0.0
    %v322 = vmax.f32 %v301, 0.0
    %v323 = vmax.f32 %v304, 0.0
    %v324 = vmax.f32 %v307, 0.0
    %v325 = vmax.f32 %v310, 0.0
    %v326 = vmax.f32 %v313, 0.0
    %v327 = vmax.f32 %v316, 0.0
    %v328 = vmax.f32 %v319, 0.0
    %v329 = vld [vmem:[%s5] sm:$0x7]
    %331 = vset.pattern.permute.xlu0 0
    %332 = vperm.xlu0 %331, %v43
    %v333 = vpop.permute.xlu0 %332
    %v336 = vsel %vm255, %v329, 0
    %338 = vmatpush.msra.mxu0 0.0
    %339 = vmatpush.msra.mxu0 0.0
    %340 = vmatpush.msra.mxu0 0.0
    %341 = vmatpush.msra.mxu0 0.0
    %342 = vmatpush.msra.mxu0 0.0
    %343 = vmatpush.msra.mxu0 0.0
    %344 = vmatpush.msra.mxu0 0.0
    %345 = vmatpush.msra.mxu0 0.0
    %346 = vmatpush.msra.mxu0 %v328
    %347 = vmatpush.msra.mxu0 %v327
    %348 = vmatpush.msra.mxu0 %v326
    %349 = vmatpush.msra.mxu0 %v325
    %350 = vmatpush.msra.mxu0 %v324
    %351 = vmatpush.msra.mxu0 %v323
    %352 = vmatpush.msra.mxu0 %v322
    %353 = vmatpush.msra.mxu0 %v321
    %354 = vmatmul.f32.gmra.mxu0 %v336
    %v355 = vpop.f32.mrf.mxu0
    %v356 = vadd.f32 %v333, %v355
    %357 = vdwg.mxu0
    %358 = vst [vmem:[#allocation2] sm:$0x7] %v356
    // Predicated region
    $region30: #{tpu_custom_call.1} parent=1 // pred_check
      _
    $region31: #{tpu_custom_call.1} parent=1 // pred_check_branch
      %360 = sbr.rel (0) target = $region33
    $region32: #{tpu_custom_call.1} parent=1 // pred_region
      %362 = vsyncadd [#allocation3], 0
      %s364 = sshll.u32 [#allocation2], 4
      %s365 = int_to_ptr.vmem [resolvable:$true] %s364
      %s366 = sshll.u32 %s7, 4
      %s367 = int_to_ptr.hbm [resolvable:$true] %s366
      %369 = dma.vmem_to_hbm [thread:$0]  %s365, 64, %s367, [#allocation3]
    $region33: #{tpu_custom_call.1} parent=1 // pred_fallthru
      _
    // Predicated region
    $region34: #{tpu_custom_call.1} parent=1 // pred_check
      _
    $region35: #{tpu_custom_call.1} parent=1 // pred_check_branch
      %371 = sbr.rel (0) target = $region37
    $region36: #{tpu_custom_call.1} parent=1 // pred_region
      %373 = dma.done [#allocation3], 64
    $region37: #{tpu_custom_call.1} parent=1 // pred_fallthru
      _
    %374 = vsyncpa [#allocation3], 1

</llo_original>
